<compile_context>
chip_gen: v7x
topology: tpu7x:2x2x1
jax: 0.10.0
libtpu: 0.0.40
codegen_flags: <defaults>
</compile_context>

<pallas_src>
import functools

import jax
import jax.numpy as jnp
from jax.experimental import pallas as pl
from jax.experimental.pallas import tpu as pltpu


def _round_up(x, m):
    return ((x + m - 1) // m) * m


def _mlp_kernel(x_ref, w1_ref, b1_ref, w2_ref, b2_ref, o_ref, *, out_layout):
    """One batch tile of: out = sigmoid(x @ W1 + b1) @ W2 + b2."""
    # Layer 1 on the MXU (bf16 or f32 operands), f32 accumulation.
    z = jnp.dot(x_ref[...], w1_ref[...], preferred_element_type=jnp.float32)
    z = z + b1_ref[...]
    # Logistic middle units via a single EUP push (tanh) + VPU mul/add:
    # sigmoid(z) = 0.5 * tanh(0.5 * z) + 0.5  (vs exp + divide = 2 EUP pushes).
    h = 0.5 * jnp.tanh(0.5 * z) + 0.5

    if out_layout == "row":
        # O == 1, lane-dense output row: (1, Hp) x (tb, Hp)^T -> (1, tb).
        # Same rhs-transposed contraction pattern as q @ k^T in attention.
        out = pl.dot(w2_ref[...], h, trans_b=True) + b2_ref[0, 0]
    elif out_layout == "col":
        # O == 1 fallback for tiny / unaligned batch tiles: VPU multiply +
        # lane reduction against the lane-dense (1, Hp) weight row.
        out = jnp.sum(h * w2_ref[...], axis=-1, keepdims=True) + b2_ref[0, 0]
    else:
        # General O > 1: keep h and W2 in f32 for second-layer accuracy.
        out = jnp.dot(h, w2_ref[...], preferred_element_type=jnp.float32)
        out = out + b2_ref[...]

    o_ref[...] = out.astype(o_ref.dtype)


def mlp_forward(x, w1_t, b1, w2_t, b2, *, compute_dtype=jnp.bfloat16, tb=2048):
    """
    x:    (B, F)  input
    w1_t: (F, H)  hidden weights, pre-transposed to (in, out)
    b1:   (H,) or (1, H)
    w2_t: (H, O)  output weights, pre-transposed to (in, out)
    b2:   (O,) or (1, O)
    Returns (B, O) float32.
    """
    B, F = x.shape
    H = w1_t.shape[1]
    O = w2_t.shape[1]

    b1 = jnp.reshape(b1, (1, H)).astype(jnp.float32)
    b2 = jnp.reshape(b2, (1, O)).astype(jnp.float32)

    # --- Pad hidden dim to a multiple of 128 lanes (exact padding:
    #     padded z cols = 0, sigmoid(0)=0.5, times zero W2 rows -> 0).
    #     F is intentionally NOT padded (it would 4x the dominant HBM stream).
    Hp = _round_up(H, 128)
    if Hp != H:
        w1_t = jnp.pad(w1_t, ((0, 0), (0, Hp - H)))
        b1 = jnp.pad(b1, ((0, 0), (0, Hp - H)))
        w2_t = jnp.pad(w2_t, ((0, Hp - H), (0, 0)))

    dsize = jnp.dtype(compute_dtype).itemsize
    sub = 8 if dsize >= 4 else 16

    # --- Batch tiling: large tiles amortize the ~0.35us/step overhead.
    tb = max(sub, min(int(tb), _round_up(B, sub)))
    tb = _round_up(tb, sub)
    # Keep >= 4 grid steps for large batches (2 per TensorCore on v7x,
    # plus DMA/compute overlap everywhere).
    if B >= 512:
        tb = min(tb, _round_up(-(-B // 4), sub))
    # Lane-dense O==1 output needs 128-aligned tiles when the grid has >1 step.
    if O == 1 and tb >= 128:
        tb = _round_up(tb, 128)

    def vmem_est(tb_):
        lane = lambda n: _round_up(max(n, 1), 128)
        sub8 = lambda n: _round_up(max(n, 1), 8)
        est = 2 * sub8(tb_) * lane(F) * dsize      # x tiles (double-buffered)
        est += 2 * sub8(F) * lane(Hp) * dsize      # W1 (double-buffered by BlockSpec)
        est += 2 * 8 * lane(Hp) * 4                # b1
        if O == 1:
            est += 2 * 8 * lane(Hp) * 4            # W2 row (f32); b2 lives in SMEM
            est += 2 * 8 * lane(tb_) * 4           # lane-dense out row tiles
        else:
            est += 2 * sub8(Hp) * lane(O) * 4      # W2 (f32)
            est += 2 * 8 * lane(O) * 4             # b2
            est += 2 * sub8(tb_) * lane(O) * 4     # out tiles
        est += 5 * sub8(tb_) * lane(Hp) * 4        # z / h / matmul temporaries (f32)
        return est + (2 << 20)                     # slack for Mosaic internals

    # Shrink tb if the per-step working set would blow the VMEM budget
    # (keeps well inside v7x's 64 MiB physical VMEM with room for XLA fusions).
    while tb // 2 >= max(sub, 128) and vmem_est(tb) > (28 << 20):
        tb //= 2
    # TODO(synk): very large F/H would need the resident W1 tiled along a
    # reduction grid axis; not needed for this module's sizes.

    Bp = _round_up(B, tb)
    if Bp != B:
        x = jnp.pad(x, ((0, Bp - B), (0, 0)))
    num_tiles = Bp // tb
    grid = (num_tiles,)

    if O == 1:
        out_layout = "row" if (num_tiles == 1 or tb % 128 == 0) else "col"
    else:
        out_layout = "general"

    # --- dtypes: bf16 x/W1 halves the dominant HBM stream on every generation
    #     (the MXU takes bf16 operands with f32 accumulation on v5e/v6e/v7x);
    #     biases, h and W2 stay f32.
    x = x.astype(compute_dtype)
    w1_t = w1_t.astype(compute_dtype)

    in_specs = [
        pl.BlockSpec((tb, F), lambda i: (i, 0)),    # x: tiled over batch
        pl.BlockSpec((F, Hp), lambda i: (0, 0)),    # W1: VMEM-resident
        pl.BlockSpec((1, Hp), lambda i: (0, 0)),    # b1: VMEM-resident
    ]
    if O == 1:
        # Lane-dense (1, Hp) f32 weight row; scalar bias through SMEM.
        w2_arg = w2_t.reshape(1, Hp).astype(jnp.float32)
        b2_arg = b2.reshape(1, 1)
        in_specs.append(pl.BlockSpec((1, Hp), lambda i: (0, 0)))
        in_specs.append(pl.BlockSpec(memory_space=pltpu.MemorySpace.SMEM))
    else:
        w2_arg = w2_t.astype(jnp.float32)
        b2_arg = b2
        in_specs.append(pl.BlockSpec((Hp, O), lambda i: (0, 0)))
        in_specs.append(pl.BlockSpec((1, O), lambda i: (0, 0)))

    if out_layout == "row":
        # Single lane-dense output row: each grid step writes lanes [i*tb, (i+1)*tb).
        out_shape = jax.ShapeDtypeStruct((1, Bp), jnp.float32)
        out_spec = pl.BlockSpec((1, tb), lambda i: (0, i))
    else:
        out_shape = jax.ShapeDtypeStruct((Bp, O), jnp.float32)
        out_spec = pl.BlockSpec((tb, O), lambda i: (i, 0))

    kernel = functools.partial(_mlp_kernel, out_layout=out_layout)

    out_padded = pl.pallas_call(
        kernel,
        out_shape=out_shape,
        grid=grid,
        in_specs=in_specs,
        out_specs=out_spec,
        compiler_params=pltpu.CompilerParams(
            dimension_semantics=("parallel",),      # both TCs on v7x
            vmem_limit_bytes=int(min(max(vmem_est(tb), 8 << 20), 40 << 20)),
        ),
    )(x, w1_t, b1, w2_arg, b2_arg)

    if out_layout == "row":
        return out_padded[0, :B].reshape(B, 1)
    return out_padded[:B]


def init_params(key, input_features, hidden_units, output_units):
    """Deterministic synthetic init (PyTorch-Linear-like uniform fan-in bound)."""
    k1, k2, k3, k4 = jax.random.split(key, 4)
    bound1 = 1.0 / jnp.sqrt(input_features)
    bound2 = 1.0 / jnp.sqrt(hidden_units)
    # Stored already transposed to (in, out) for the kernel.
    w1_t = jax.random.uniform(k1, (input_features, hidden_units),
                              minval=-bound1, maxval=bound1, dtype=jnp.float32)
    b1 = jax.random.uniform(k2, (1, hidden_units),
                            minval=-bound1, maxval=bound1, dtype=jnp.float32)
    w2_t = jax.random.uniform(k3, (hidden_units, output_units),
                              minval=-bound2, maxval=bound2, dtype=jnp.float32)
    b2 = jax.random.uniform(k4, (1, output_units),
                            minval=-bound2, maxval=bound2, dtype=jnp.float32)
    return w1_t, b1, w2_t, b2


if __name__ == "__main__":
    key = jax.random.PRNGKey(0)
    kx, kp, kq, kx2 = jax.random.split(key, 4)

    batch, input_features, hidden_units, output_units = 8, 32, 100, 1

    x = jax.random.normal(kx, (batch, input_features), dtype=jnp.float32)
    w1_t, b1, w2_t, b2 = init_params(kp, input_features, hidden_units, output_units)

    # Pure-JAX reference of the same math.
    def ref_fn(xv, w1v, b1v, w2v, b2v):
        return jax.nn.sigmoid(xv @ w1v + b1v) @ w2v + b2v

    ref = ref_fn(x, w1_t, b1, w2_t, b2)

    # f32 path, single batch tile, lane-dense O==1 output.
    out = mlp_forward(x, w1_t, b1, w2_t, b2, compute_dtype=jnp.float32)
    jax.block_until_ready(out)
    assert out.shape == (batch, output_units)
    assert jnp.allclose(out, ref, atol=2e-3, rtol=2e-3)

    # Default bf16-input fast path (f32 accumulation) — loose tolerance.
    out_bf16 = mlp_forward(x, w1_t, b1, w2_t, b2)
    jax.block_until_ready(out_bf16)
    assert out_bf16.shape == (batch, output_units)
    assert jnp.allclose(out_bf16, ref, atol=0.1, rtol=0.05)

    # Multi-tile grid with tiny unaligned tiles (column-output fallback path).
    xb = jnp.tile(x, (3, 1))
    out_tiled = mlp_forward(xb, w1_t, b1, w2_t, b2, compute_dtype=jnp.float32, tb=8)
    jax.block_until_ready(out_tiled)
    assert jnp.allclose(out_tiled, jnp.tile(ref, (3, 1)), atol=2e-3, rtol=2e-3)

    # Larger batch: exercises the >=4-grid-step cap and the lane-dense
    # multi-tile (tb % 128 == 0) output path.
    x_big = jax.random.normal(kx2, (1024, input_features), dtype=jnp.float32)
    ref_big = ref_fn(x_big, w1_t, b1, w2_t, b2)
    out_big = mlp_forward(x_big, w1_t, b1, w2_t, b2, compute_dtype=jnp.float32)
    jax.block_until_ready(out_big)
    assert out_big.shape == (1024, 1)
    assert jnp.allclose(out_big, ref_big, atol=2e-3, rtol=2e-3)

    # General output_units > 1 path (MXU second layer, h/W2 kept in f32).
    w1m, b1m, w2m, b2m = init_params(kq, input_features, hidden_units, 4)
    ref_m = ref_fn(x, w1m, b1m, w2m, b2m)
    out_m = mlp_forward(x, w1m, b1m, w2m, b2m, compute_dtype=jnp.float32)
    jax.block_until_ready(out_m)
    assert out_m.shape == (batch, 4)
    assert jnp.allclose(out_m, ref_m, atol=2e-3, rtol=2e-3)

    print("KERNEL_OK")
</pallas_src>

<mosaic_0001>
module attributes {stable_mosaic.version = 11 : i64} {
  func.func @_mlp_kernel(%arg0: i32, %arg1: memref<8x32xf32, #tpu.memory_space<vmem>>, %arg2: memref<32x128xf32, #tpu.memory_space<vmem>>, %arg3: memref<1x128xf32, #tpu.memory_space<vmem>>, %arg4: memref<1x128xf32, #tpu.memory_space<vmem>>, %arg5: memref<1x1xf32, #tpu.memory_space<smem>>, %arg6: memref<1x8xf32, #tpu.memory_space<vmem>>) attributes {dimension_semantics = [#tpu.dimension_semantics<parallel>], iteration_bounds = array<i64: 1>, scalar_prefetch = 0 : i64, scratch_operands = 0 : i64, tpu.core_type = #tpu.core_type<tc>, window_params = [{transform_indices = @transform_0, window_bounds = array<i64: 8, 32>}, {pipeline_mode = #tpu.pipeline_mode<synchronous>, transform_indices = @transform_1, window_bounds = array<i64: 32, 128>}, {pipeline_mode = #tpu.pipeline_mode<synchronous>, transform_indices = @transform_2, window_bounds = array<i64: 1, 128>}, {pipeline_mode = #tpu.pipeline_mode<synchronous>, transform_indices = @transform_3, window_bounds = array<i64: 1, 128>}, {transform_indices = @transform_4, window_bounds = array<i64: 1, 1>}, {transform_indices = @transform_5, window_bounds = array<i64: 1, 8>}]} {
    %c0 = arith.constant 0 : index
    %c0_0 = arith.constant 0 : index
    %0 = vector.load %arg1[%c0, %c0_0] : memref<8x32xf32, #tpu.memory_space<vmem>>, vector<8x32xf32>
    %c0_1 = arith.constant 0 : index
    %c0_2 = arith.constant 0 : index
    %1 = vector.load %arg2[%c0_1, %c0_2] : memref<32x128xf32, #tpu.memory_space<vmem>>, vector<32x128xf32>
    %cst = arith.constant dense<0.000000e+00> : vector<8x128xf32>
    %2 = tpu.matmul %0, %1, %cst {dimension_numbers = #tpu.dot_dimension_numbers<[1], [0], [0], [1], [0, 0, 1, 1], [], []>} : vector<8x32xf32>, vector<32x128xf32>, vector<8x128xf32> -> vector<8x128xf32>
    %c0_3 = arith.constant 0 : index
    %c0_4 = arith.constant 0 : index
    %3 = vector.load %arg3[%c0_3, %c0_4] : memref<1x128xf32, #tpu.memory_space<vmem>>, vector<1x128xf32>
    %4 = vector.broadcast %3 : vector<1x128xf32> to vector<8x128xf32>
    %5 = arith.addf %2, %4 : vector<8x128xf32>
    %cst_5 = arith.constant 5.000000e-01 : f32
    %6 = vector.broadcast %cst_5 : f32 to vector<8x128xf32>
    %7 = arith.mulf %6, %5 : vector<8x128xf32>
    %8 = math.tanh %7 : vector<8x128xf32>
    %cst_6 = arith.constant 5.000000e-01 : f32
    %9 = vector.broadcast %cst_6 : f32 to vector<8x128xf32>
    %10 = arith.mulf %9, %8 : vector<8x128xf32>
    %cst_7 = arith.constant 5.000000e-01 : f32
    %11 = vector.broadcast %cst_7 : f32 to vector<8x128xf32>
    %12 = arith.addf %10, %11 : vector<8x128xf32>
    %c0_8 = arith.constant 0 : index
    %c0_9 = arith.constant 0 : index
    %13 = vector.load %arg4[%c0_8, %c0_9] : memref<1x128xf32, #tpu.memory_space<vmem>>, vector<1x128xf32>
    %cst_10 = arith.constant dense<0.000000e+00> : vector<1x8xf32>
    %14 = tpu.matmul %13, %12, %cst_10 {dimension_numbers = #tpu.dot_dimension_numbers<[1], [1], [0], [0], [0, 0, 1, 0], [], []>} : vector<1x128xf32>, vector<8x128xf32>, vector<1x8xf32> -> vector<1x8xf32>
    %c0_11 = arith.constant 0 : index
    %c0_12 = arith.constant 0 : index
    %15 = memref.load %arg5[%c0_11, %c0_12] : memref<1x1xf32, #tpu.memory_space<smem>>
    %16 = vector.broadcast %15 : f32 to vector<1x8xf32>
    %17 = arith.addf %14, %16 : vector<1x8xf32>
    %c0_13 = arith.constant 0 : index
    %c0_14 = arith.constant 0 : index
    %18 = vector.load %arg6[%c0_13, %c0_14] : memref<1x8xf32, #tpu.memory_space<vmem>>, vector<1x8xf32>
    tpu.vector_store %arg6[%c0_13, %c0_14], %17 {strides = array<i32>} : memref<1x8xf32, #tpu.memory_space<vmem>>, vector<1x8xf32>,
    return
  }
  func.func @transform_0(%arg0: i32) -> (i32, i32) {
    %c0_i32 = arith.constant 0 : i32
    %c0_i32_0 = arith.constant 0 : i32
    return %arg0, %c0_i32 : i32, i32
  }
  func.func @transform_1(%arg0: i32) -> (i32, i32) {
    %c0_i32 = arith.constant 0 : i32
    %c0_i32_0 = arith.constant 0 : i32
    %c0_i32_1 = arith.constant 0 : i32
    return %c0_i32, %c0_i32_0 : i32, i32
  }
  func.func @transform_2(%arg0: i32) -> (i32, i32) {
    %c0_i32 = arith.constant 0 : i32
    %c0_i32_0 = arith.constant 0 : i32
    %c0_i32_1 = arith.constant 0 : i32
    return %c0_i32, %c0_i32_0 : i32, i32
  }
  func.func @transform_3(%arg0: i32) -> (i32, i32) {
    %c0_i32 = arith.constant 0 : i32
    %c0_i32_0 = arith.constant 0 : i32
    %c0_i32_1 = arith.constant 0 : i32
    return %c0_i32, %c0_i32_0 : i32, i32
  }
  func.func @transform_4(%arg0: i32) -> (i32, i32) {
    %c0_i32 = arith.constant 0 : i32
    %c0_i32_0 = arith.constant 0 : i32
    %c0_i32_1 = arith.constant 0 : i32
    return %c0_i32, %c0_i32_0 : i32, i32
  }
  func.func @transform_5(%arg0: i32) -> (i32, i32) {
    %c0_i32 = arith.constant 0 : i32
    %c0_i32_0 = arith.constant 0 : i32
    return %c0_i32, %arg0 : i32, i32
  }
}

</mosaic_0001>

<llo_original>
// kernel: tpu_custom_call.1
$region0: #{tpu_custom_call.1}
  #allocation0 [shape = 'u32[]', space=smem, size = 0x4, offset = 0x4, fixed_abs, tag = 'smem constant byte address 0x4 - core index']
  #allocation1 [shape = 'u32[144,128]{1,0:T(1,128)}', space=vmem, size = 0x12000, scoped, tag = 'internal scratch']
  #allocation2 [shape = 'f32[1,1]{1,0:T(1,128)S(6)}', space=smem, size = 0x200, scoped, tag = 'scoped memory for tpu_custom_call.1']
  %s0 = inlined_call_operand.hbm [shape: f32[8,32], index: 0, kind: input, shape index: {}]
  %s1 = inlined_call_operand.hbm [shape: f32[32,128], index: 1, kind: input, shape index: {}]
  %s2 = inlined_call_operand.vmem [shape: f32[1,128], index: 2, kind: input, shape index: {}]
  %s3 = inlined_call_operand.vmem [shape: f32[1,128], index: 3, kind: input, shape index: {}]
  %s4 = inlined_call_operand.<no memory space> [shape: f32[1,1], index: 4, kind: input, shape index: {}]
  %s5 = inlined_call_operand.hbm [shape: f32[1,8], index: 5, kind: output, shape index: {}]
  %s6 = sld [smem:[#allocation0]]
  $region38: #{tpu_custom_call.1} parent=0
    _
  %s8 = ssub.s32 1, %s6
  %s9 = scalar_select 0, %s8, %s6
  %10 = sst [smem:[#allocation2]] %s4
  $region1: #{tpu_custom_call.1} parent=0
    #allocation3 [shape = 'u8[4096]{0}', space=vmem, size = 0x1000, scoped, tag = 'input window, operand 0, single buffered']
    #allocation4 [shape = 's32[1]{0}', space=sflag, size = 0x4, scoped, tag = 'scoped memory for tpu_custom_call.1']
    #allocation5 [shape = 's32[1]{0}', space=sflag, size = 0x4, scoped, tag = 'scoped memory for tpu_custom_call.1']
    #allocation6 [shape = 'u8[16384]{0}', space=vmem, size = 0x4000, scoped, tag = 'input window, operand 1, single buffered']
    #allocation7 [shape = 's32[1]{0}', space=sflag, size = 0x4, scoped, tag = 'scoped memory for tpu_custom_call.1']
    #allocation8 [shape = 'u8[512]{0}', space=vmem, size = 0x400, scoped, tag = 'output window, operand 0, single buffered']
    %11 = vsyncpa [#allocation4], 0
    %12 = vsyncpa [#allocation7], 0
    %13 = vsyncpa [#allocation5], 0
    // Predicated region
    $region2: #{tpu_custom_call.1} parent=1 // pred_check
      _
    $region3: #{tpu_custom_call.1} parent=1 // pred_check_branch
      %15 = sbr.rel (0) target = $region5
    $region4: #{tpu_custom_call.1} parent=1 // pred_region
      %s17 = ssub.s32 128, 128
      %18 = vsyncadd [#allocation4], %s17
      %s20 = sshll.u32 [#allocation3], 4
      %s21 = int_to_ptr.vmem [resolvable:$true] %s20
      %23 = dma.hbm_to_vmem [thread:$0]  %s0, 128, %s21, [#allocation4]
    $region5: #{tpu_custom_call.1} parent=1 // pred_fallthru
      _
    // Predicated region
    $region6: #{tpu_custom_call.1} parent=1 // pred_check
      _
    $region7: #{tpu_custom_call.1} parent=1 // pred_check_branch
      %25 = sbr.rel (0) target = $region9
    $region8: #{tpu_custom_call.1} parent=1 // pred_region
      %s27 = ssub.s32 512, 512
      %28 = vsyncadd [#allocation7], %s27
      %s29 = sshll.u32 [#allocation6], 4
      %s30 = int_to_ptr.vmem [resolvable:$true] %s29
      %35 = dma.hbm_to_vmem [thread:$0]  %s1, 512, %s30, [#allocation7], 128, 128, 8
    $region9: #{tpu_custom_call.1} parent=1 // pred_fallthru
      _
    // Predicated region
    $region10: #{tpu_custom_call.1} parent=1 // pred_check
      _
    $region11: #{tpu_custom_call.1} parent=1 // pred_check_branch
      %37 = sbr.rel (0) target = $region13
    $region12: #{tpu_custom_call.1} parent=1 // pred_region
      _
    $region13: #{tpu_custom_call.1} parent=1 // pred_fallthru
      _
    // Predicated region
    $region14: #{tpu_custom_call.1} parent=1 // pred_check
      _
    $region15: #{tpu_custom_call.1} parent=1 // pred_check_branch
      %39 = sbr.rel (0) target = $region17
    $region16: #{tpu_custom_call.1} parent=1 // pred_region
      _
    $region17: #{tpu_custom_call.1} parent=1 // pred_fallthru
      _
    // Predicated region
    $region18: #{tpu_custom_call.1} parent=1 // pred_check
      _
    $region19: #{tpu_custom_call.1} parent=1 // pred_check_branch
      %41 = sbr.rel (0) target = $region21
    $region20: #{tpu_custom_call.1} parent=1 // pred_region
      _
    $region21: #{tpu_custom_call.1} parent=1 // pred_fallthru
      _
    // Predicated region
    $region22: #{tpu_custom_call.1} parent=1 // pred_check
      _
    $region23: #{tpu_custom_call.1} parent=1 // pred_check_branch
      %43 = sbr.rel (0) target = $region25
    $region24: #{tpu_custom_call.1} parent=1 // pred_region
      %44 = dma.done [#allocation4], 128
    $region25: #{tpu_custom_call.1} parent=1 // pred_fallthru
      _
    // Predicated region
    $region26: #{tpu_custom_call.1} parent=1 // pred_check
      _
    $region27: #{tpu_custom_call.1} parent=1 // pred_check_branch
      %46 = sbr.rel (0) target = $region29
    $region28: #{tpu_custom_call.1} parent=1 // pred_region
      %47 = dma.done [#allocation7], 512
    $region29: #{tpu_custom_call.1} parent=1 // pred_fallthru
      _
    %v48 = vld [vmem:[#allocation3] sm:$0xff]
    %v49 = vld [vmem:[#allocation6] sm:$0xff]
    %v50 = vld [vmem:[#allocation6 + $0x8] sm:$0xff]
    %v51 = vld [vmem:[#allocation6 + $0x10] sm:$0xff]
    %v52 = vld [vmem:[#allocation6 + $0x18] sm:$0xff]
    %v53 = vld [vmem:[%s2] sm:$0x1]
    %v55 = vlaneseq
    %v56 = vshrl.u32 %v55, 7
    %v57 = vsub.s32 0, %v56
    %v58 = vrot.slane %v53, %v57
    %vm60 = vcmask 261120
    %v62 = vsel %vm60, %v48, 0
    %64 = vmatprep.subr.mxu0 0.0
    %65 = vmatpush1.msra.mxu0 %v49
    %66 = vmatprep.subr.mxu0 0.0
    %67 = vmatpush1.msra.mxu0 %v50
    %68 = vmatprep.subr.mxu0 0.0
    %69 = vmatpush1.msra.mxu0 %v51
    %70 = vmatprep.subr.mxu0 0.0
    %71 = vmatpush1.msra.mxu0 %v52
    %72 = vmatprep.subr.mxu0 0.0
    %73 = vmatpush1.msra.mxu0 0.0
    %74 = vmatprep.subr.mxu0 0.0
    %75 = vmatpush1.msra.mxu0 0.0
    %76 = vmatprep.subr.mxu0 0.0
    %77 = vmatpush1.msra.mxu0 0.0
    %78 = vmatprep.subr.mxu0 0.0
    %79 = vmatpush1.msra.mxu0 0.0
    %80 = vmatprep.subr.mxu0 0.0
    %81 = vmatpush1.msra.mxu0 0.0
    %82 = vmatprep.subr.mxu0 0.0
    %83 = vmatpush1.msra.mxu0 0.0
    %84 = vmatprep.subr.mxu0 0.0
    %85 = vmatpush1.msra.mxu0 0.0
    %86 = vmatprep.subr.mxu0 0.0
    %87 = vmatpush1.msra.mxu0 0.0
    %88 = vmatprep.subr.mxu0 0.0
    %89 = vmatpush1.msra.mxu0 0.0
    %90 = vmatprep.subr.mxu0 0.0
    %91 = vmatpush1.msra.mxu0 0.0
    %92 = vmatprep.subr.mxu0 0.0
    %93 = vmatpush1.msra.mxu0 0.0
    %94 = vmatprep.subr.mxu0 0.0
    %95 = vmatpush1.msra.mxu0 0.0
    %96 = vmatprep.subr.mxu0 0.0
    %97 = vmatpush1.msra.mxu0 0.0
    %98 = vmatprep.subr.mxu0 0.0
    %99 = vmatpush1.msra.mxu0 0.0
    %100 = vmatprep.subr.mxu0 0.0
    %101 = vmatpush1.msra.mxu0 0.0
    %102 = vmatprep.subr.mxu0 0.0
    %103 = vmatpush1.msra.mxu0 0.0
    %104 = vmatprep.subr.mxu0 0.0
    %105 = vmatpush1.msra.mxu0 0.0
    %106 = vmatprep.subr.mxu0 0.0
    %107 = vmatpush1.msra.mxu0 0.0
    %108 = vmatprep.subr.mxu0 0.0
    %109 = vmatpush1.msra.mxu0 0.0
    %110 = vmatprep.subr.mxu0 0.0
    %111 = vmatpush1.msra.mxu0 0.0
    %112 = vmatprep.subr.mxu0 0.0
    %113 = vmatpush1.msra.mxu0 0.0
    %114 = vmatprep.subr.mxu0 0.0
    %115 = vmatpush1.msra.mxu0 0.0
    %116 = vmatprep.subr.mxu0 0.0
    %117 = vmatpush1.msra.mxu0 0.0
    %118 = vmatprep.subr.mxu0 0.0
    %119 = vmatpush1.msra.mxu0 0.0
    %120 = vmatprep.subr.mxu0 0.0
    %121 = vmatpush1.msra.mxu0 0.0
    %122 = vmatprep.subr.mxu0 0.0
    %123 = vmatpush1.msra.mxu0 0.0
    %124 = vmatprep.subr.mxu0 0.0
    %125 = vmatpush1.msra.mxu0 0.0
    %126 = vmatprep.subr.mxu0 0.0
    %127 = vmatpush1.msra.mxu0 0.0
    %128 = vmatprep.mubr.f32.mxu0 0.0
    %129 = vmatmul.mubr.f32.gmra.mrb[0].mxu0 %v62
    %v130 = vpop.f32.mrb[0].mxu0
    %v131 = vadd.f32 %v58, %v130
    %v132 = vpop.f32.mrb[0].mxu0
    %133 = vdwg.mxu0
    %v134 = vmul.f32 %v131, 0.5
    %v135 = vtanh.pop %v134
    %v136 = vmul.f32 %v135, 0.5
    %v137 = vadd.f32 %v136, 0.5
    %v138 = vld [vmem:[%s3] sm:$0x1]
    %s139 = sld [smem:[#allocation2]]
    %v140 = vstv %s139
    %141 = vmatprep.subr.mxu0 0.0
    %142 = vmatpush1.xpose.msra.mxu0 %v137
    %143 = vmatprep.subr.mxu0 0.0
    %144 = vmatpush1.xpose.msra.mxu0 0.0
    %145 = vmatprep.subr.mxu0 0.0
    %146 = vmatpush1.xpose.msra.mxu0 0.0
    %147 = vmatprep.subr.mxu0 0.0
    %148 = vmatpush1.xpose.msra.mxu0 0.0
    %149 = vmatprep.subr.mxu0 0.0
    %150 = vmatpush1.xpose.msra.mxu0 0.0
    %151 = vmatprep.subr.mxu0 0.0
    %152 = vmatpush1.xpose.msra.mxu0 0.0
    %153 = vmatprep.subr.mxu0 0.0
    %154 = vmatpush1.xpose.msra.mxu0 0.0
    %155 = vmatprep.subr.mxu0 0.0
    %156 = vmatpush1.xpose.msra.mxu0 0.0
    %157 = vmatprep.subr.mxu0 0.0
    %158 = vmatpush1.xpose.msra.mxu0 0.0
    %159 = vmatprep.subr.mxu0 0.0
    %160 = vmatpush1.xpose.msra.mxu0 0.0
    %161 = vmatprep.subr.mxu0 0.0
    %162 = vmatpush1.xpose.msra.mxu0 0.0
    %163 = vmatprep.subr.mxu0 0.0
    %164 = vmatpush1.xpose.msra.mxu0 0.0
    %165 = vmatprep.subr.mxu0 0.0
    %166 = vmatpush1.xpose.msra.mxu0 0.0
    %167 = vmatprep.subr.mxu0 0.0
    %168 = vmatpush1.xpose.msra.mxu0 0.0
    %169 = vmatprep.subr.mxu0 0.0
    %170 = vmatpush1.xpose.msra.mxu0 0.0
    %171 = vmatprep.subr.mxu0 0.0
    %172 = vmatpush1.xpose.msra.mxu0 0.0
    %173 = vmatprep.subr.mxu0 0.0
    %174 = vmatpush1.xpose.msra.mxu0 0.0
    %175 = vmatprep.subr.mxu0 0.0
    %176 = vmatpush1.xpose.msra.mxu0 0.0
    %177 = vmatprep.subr.mxu0 0.0
    %178 = vmatpush1.xpose.msra.mxu0 0.0
    %179 = vmatprep.subr.mxu0 0.0
    %180 = vmatpush1.xpose.msra.mxu0 0.0
    %181 = vmatprep.subr.mxu0 0.0
    %182 = vmatpush1.xpose.msra.mxu0 0.0
    %183 = vmatprep.subr.mxu0 0.0
    %184 = vmatpush1.xpose.msra.mxu0 0.0
    %185 = vmatprep.subr.mxu0 0.0
    %186 = vmatpush1.xpose.msra.mxu0 0.0
    %187 = vmatprep.subr.mxu0 0.0
    %188 = vmatpush1.xpose.msra.mxu0 0.0
    %189 = vmatprep.subr.mxu0 0.0
    %190 = vmatpush1.xpose.msra.mxu0 0.0
    %191 = vmatprep.subr.mxu0 0.0
    %192 = vmatpush1.xpose.msra.mxu0 0.0
    %193 = vmatprep.subr.mxu0 0.0
    %194 = vmatpush1.xpose.msra.mxu0 0.0
    %195 = vmatprep.subr.mxu0 0.0
    %196 = vmatpush1.xpose.msra.mxu0 0.0
    %197 = vmatprep.subr.mxu0 0.0
    %198 = vmatpush1.xpose.msra.mxu0 0.0
    %199 = vmatprep.subr.mxu0 0.0
    %200 = vmatpush1.xpose.msra.mxu0 0.0
    %201 = vmatprep.subr.mxu0 0.0
    %202 = vmatpush1.xpose.msra.mxu0 0.0
    %203 = vmatprep.subr.mxu0 0.0
    %204 = vmatpush1.xpose.msra.mxu0 0.0
    %205 = vmatprep.mubr.f32.mxu0 0.0
    %206 = vmatmul.mubr.f32.gmra.mrb[0].mxu0 %v138
    %v207 = vpop.f32.mrb[0].mxu0
    %v208 = vadd.f32 %v140, %v207
    %v209 = vpop.f32.mrb[0].mxu0
    %210 = vdwg.mxu0
    %vm211 = vcmask 57344
    %212 = vst.msk [vmem:[#allocation8] sm:$0x1] %vm211, %v208
    // Predicated region
    $region30: #{tpu_custom_call.1} parent=1 // pred_check
      _
    $region31: #{tpu_custom_call.1} parent=1 // pred_check_branch
      %214 = sbr.rel (0) target = $region33
    $region32: #{tpu_custom_call.1} parent=1 // pred_region
      %s216 = ssub.s32 16, 16
      %217 = vsyncadd [#allocation5], %s216
      %s219 = sshll.u32 [#allocation8], 4
      %s220 = int_to_ptr.vmem [resolvable:$true] %s219
      %222 = dma.vmem_to_hbm [thread:$0]  %s220, 16, %s5, [#allocation5]
    $region33: #{tpu_custom_call.1} parent=1 // pred_fallthru
      _
    // Predicated region
    $region34: #{tpu_custom_call.1} parent=1 // pred_check
      _
    $region35: #{tpu_custom_call.1} parent=1 // pred_check_branch
      %224 = sbr.rel (0) target = $region37
    $region36: #{tpu_custom_call.1} parent=1 // pred_region
      %225 = dma.done [#allocation5], 16
    $region37: #{tpu_custom_call.1} parent=1 // pred_fallthru
      _
    %226 = vsyncpa [#allocation4], 1
    %227 = vsyncpa [#allocation7], 1
    %228 = vsyncpa [#allocation5], 1

</llo_original>
